<compile_context>
chip_gen: v7x
topology: tpu7x:2x2x1
jax: 0.10.0
libtpu: 0.0.40
codegen_flags: <defaults>
</compile_context>

<pallas_src>
import jax
import jax.numpy as jnp
from jax.experimental import pallas as pl
from jax.experimental.pallas import tpu as pltpu

IN_FEATURES = 20
OUT_FEATURES = 30
MIN_TILE_B = 8                    # sublane granularity
MAX_TILE_B = 4096                 # rows per grid step (x+out ~8 MiB dbl-buffered)
VMEM_LIMIT_BYTES = 32 * 1024 * 1024


def linear_kernel(x_ref, w_ref, b_ref, o_ref):
    # x_ref: [TB, 20], w_ref: [20, 30], b_ref: [1, 30], o_ref: [TB, 30]
    acc = jnp.dot(x_ref[...], w_ref[...], preferred_element_type=jnp.float32)
    o_ref[...] = (acc + b_ref[...]).astype(o_ref.dtype)


def _round_up(x, m):
    return ((x + m - 1) // m) * m


def _pick_tile(batch):
    """Batch-tile size: as big as possible (up to MAX_TILE_B), but keep the
    grid length >= 2 for large batches so both v7x TensorCores get work."""
    tb = min(MAX_TILE_B, _round_up(batch, MIN_TILE_B))
    if tb >= batch and batch > 2 * MIN_TILE_B:
        tb = _round_up(-(-batch // 2), MIN_TILE_B)
    return tb


def _linear_pallas(x, w_t, b_2d):
    """x: [B, 20] f32, w_t: [20, 30] f32, b_2d: [1, 30] f32 -> [B, 30] f32."""
    batch = x.shape[0]
    tb = _pick_tile(batch)
    grid = (-(-batch // tb),)     # cdiv; ragged last block handled by Pallas

    itemsize = jnp.dtype(x.dtype).itemsize
    cost = pl.CostEstimate(
        flops=2 * batch * IN_FEATURES * OUT_FEATURES,
        transcendentals=0,
        bytes_accessed=(
            batch * IN_FEATURES            # read x
            + batch * OUT_FEATURES         # write y
            + IN_FEATURES * OUT_FEATURES   # read W (once, VMEM-resident)
            + OUT_FEATURES                 # read b
        ) * itemsize,
    )

    return pl.pallas_call(
        linear_kernel,
        out_shape=jax.ShapeDtypeStruct((batch, OUT_FEATURES), x.dtype),
        grid_spec=pltpu.PrefetchScalarGridSpec(
            num_scalar_prefetch=0,
            grid=grid,
            in_specs=[
                # x: streamed, one batch tile per grid step.
                pl.BlockSpec((tb, IN_FEATURES), lambda i: (i, 0)),
                # weight / bias: VMEM-resident across all grid steps.
                pl.BlockSpec((IN_FEATURES, OUT_FEATURES), lambda i: (0, 0)),
                pl.BlockSpec((1, OUT_FEATURES), lambda i: (0, 0)),
            ],
            out_specs=pl.BlockSpec((tb, OUT_FEATURES), lambda i: (i, 0)),
        ),
        compiler_params=pltpu.CompilerParams(
            # Independent batch tiles: v7x can shard them across its 2 TCs.
            dimension_semantics=("parallel",),
            vmem_limit_bytes=VMEM_LIMIT_BYTES,
        ),
        cost_estimate=cost,
    )(x, w_t, b_2d)


def make_tiny_model_forward(weight, bias):
    """Build the forward pass once for a given parameter set.

    weight: [30, 20] f32 (PyTorch nn.Linear layout: [out_features, in_features])
    bias:   [30]     f32
    Returns a jitted callable forward(x: [B, 20]) -> [B, 30].
    The (trivial) transpose/reshape of the parameters is hoisted out of the
    per-call path here.
    """
    w_t = jnp.asarray(weight, jnp.float32).T                     # [20, 30]
    b_2d = jnp.asarray(bias, jnp.float32).reshape(1, OUT_FEATURES)  # [1, 30]

    @jax.jit
    def forward(x):
        return _linear_pallas(x, w_t, b_2d)

    return forward


if __name__ == "__main__":
    key = jax.random.PRNGKey(0)
    kx, kw, kb = jax.random.split(key, 3)

    # Deterministic parameter init mimicking torch.nn.Linear defaults:
    # U(-1/sqrt(fan_in), 1/sqrt(fan_in)).
    bound = 1.0 / (IN_FEATURES ** 0.5)
    weight = jax.random.uniform(
        kw, (OUT_FEATURES, IN_FEATURES), jnp.float32, -bound, bound
    )
    bias = jax.random.uniform(kb, (OUT_FEATURES,), jnp.float32, -bound, bound)

    # Small batch of inputs, consistent with Linear(20, 30).
    batch = 8
    x = jax.random.normal(kx, (batch, IN_FEATURES), jnp.float32)

    forward = make_tiny_model_forward(weight, bias)
    out = jax.block_until_ready(forward(x))

    # Sanity-check against plain JAX reference (same math as nn.Linear).
    ref = x @ weight.T + bias
    assert out.shape == (batch, OUT_FEATURES)
    assert jnp.allclose(out, ref, atol=1e-5, rtol=1e-5)

    print("KERNEL_OK")
</pallas_src>

<mosaic_0001>
module attributes {stable_mosaic.version = 11 : i64} {
  func.func @linear_kernel(%arg0: i32, %arg1: memref<8x20xf32, #tpu.memory_space<vmem>>, %arg2: memref<20x30xf32, #tpu.memory_space<vmem>>, %arg3: memref<1x30xf32, #tpu.memory_space<vmem>>, %arg4: memref<8x30xf32, #tpu.memory_space<vmem>>) attributes {dimension_semantics = [#tpu.dimension_semantics<parallel>], iteration_bounds = array<i64: 1>, scalar_prefetch = 0 : i64, scratch_operands = 0 : i64, tpu.core_type = #tpu.core_type<tc>, window_params = [{transform_indices = @transform_0, window_bounds = array<i64: 8, 20>}, {pipeline_mode = #tpu.pipeline_mode<synchronous>, transform_indices = @transform_1, window_bounds = array<i64: 20, 30>}, {pipeline_mode = #tpu.pipeline_mode<synchronous>, transform_indices = @transform_2, window_bounds = array<i64: 1, 30>}, {transform_indices = @transform_3, window_bounds = array<i64: 8, 30>}]} {
    %c0 = arith.constant 0 : index
    %c0_0 = arith.constant 0 : index
    %0 = vector.load %arg1[%c0, %c0_0] : memref<8x20xf32, #tpu.memory_space<vmem>>, vector<8x20xf32>
    %c0_1 = arith.constant 0 : index
    %c0_2 = arith.constant 0 : index
    %1 = vector.load %arg2[%c0_1, %c0_2] : memref<20x30xf32, #tpu.memory_space<vmem>>, vector<20x30xf32>
    %cst = arith.constant dense<0.000000e+00> : vector<8x30xf32>
    %2 = tpu.matmul %0, %1, %cst {dimension_numbers = #tpu.dot_dimension_numbers<[1], [0], [0], [1], [0, 0, 1, 1], [], []>} : vector<8x20xf32>, vector<20x30xf32>, vector<8x30xf32> -> vector<8x30xf32>
    %c0_3 = arith.constant 0 : index
    %c0_4 = arith.constant 0 : index
    %3 = vector.load %arg3[%c0_3, %c0_4] : memref<1x30xf32, #tpu.memory_space<vmem>>, vector<1x30xf32>
    %4 = vector.broadcast %3 : vector<1x30xf32> to vector<8x30xf32>
    %5 = arith.addf %2, %4 : vector<8x30xf32>
    %c0_5 = arith.constant 0 : index
    %c0_6 = arith.constant 0 : index
    %6 = vector.load %arg4[%c0_5, %c0_6] : memref<8x30xf32, #tpu.memory_space<vmem>>, vector<8x30xf32>
    tpu.vector_store %arg4[%c0_5, %c0_6], %5 {strides = array<i32>} : memref<8x30xf32, #tpu.memory_space<vmem>>, vector<8x30xf32>,
    return
  }
  func.func @transform_0(%arg0: i32) -> (i32, i32) {
    %c0_i32 = arith.constant 0 : i32
    %c0_i32_0 = arith.constant 0 : i32
    return %arg0, %c0_i32 : i32, i32
  }
  func.func @transform_1(%arg0: i32) -> (i32, i32) {
    %c0_i32 = arith.constant 0 : i32
    %c0_i32_0 = arith.constant 0 : i32
    %c0_i32_1 = arith.constant 0 : i32
    return %c0_i32, %c0_i32_0 : i32, i32
  }
  func.func @transform_2(%arg0: i32) -> (i32, i32) {
    %c0_i32 = arith.constant 0 : i32
    %c0_i32_0 = arith.constant 0 : i32
    %c0_i32_1 = arith.constant 0 : i32
    return %c0_i32, %c0_i32_0 : i32, i32
  }
  func.func @transform_3(%arg0: i32) -> (i32, i32) {
    %c0_i32 = arith.constant 0 : i32
    %c0_i32_0 = arith.constant 0 : i32
    return %arg0, %c0_i32 : i32, i32
  }
}

</mosaic_0001>

<llo_original>
// kernel: forward.1
$region0: #{forward.1}
  #allocation0 [shape = 'u32[]', space=smem, size = 0x4, offset = 0x4, fixed_abs, tag = 'smem constant byte address 0x4 - core index']
  #allocation1 [shape = 'u32[144,128]{1,0:T(1,128)}', space=vmem, size = 0x12000, scoped, tag = 'internal scratch']
  %s0 = inlined_call_operand.hbm [shape: f32[8,20], index: 0, kind: input, shape index: {}]
  %s1 = inlined_call_operand.hbm [shape: f32[20,30], index: 1, kind: input, shape index: {}]
  %s2 = inlined_call_operand.vmem [shape: f32[1,30], index: 2, kind: input, shape index: {}]
  %s3 = inlined_call_operand.hbm [shape: f32[8,30], index: 3, kind: output, shape index: {}]
  %s4 = sld [smem:[#allocation0]]
  $region30: #{forward.1} parent=0
    _
  %s6 = ssub.s32 1, %s4
  %s7 = scalar_select 0, %s6, %s4
  $region1: #{forward.1} parent=0
    #allocation2 [shape = 'u8[4096]{0}', space=vmem, size = 0x1000, scoped, tag = 'input window, operand 0, single buffered']
    #allocation3 [shape = 's32[1]{0}', space=sflag, size = 0x4, scoped, tag = 'scoped memory for forward.1']
    #allocation4 [shape = 's32[1]{0}', space=sflag, size = 0x4, scoped, tag = 'scoped memory for forward.1']
    #allocation5 [shape = 'u8[12288]{0}', space=vmem, size = 0x3000, scoped, tag = 'input window, operand 1, single buffered']
    #allocation6 [shape = 's32[1]{0}', space=sflag, size = 0x4, scoped, tag = 'scoped memory for forward.1']
    #allocation7 [shape = 'u8[4096]{0}', space=vmem, size = 0x1000, scoped, tag = 'output window, operand 0, single buffered']
    %8 = vsyncpa [#allocation3], 0
    %9 = vsyncpa [#allocation6], 0
    %10 = vsyncpa [#allocation4], 0
    // Predicated region
    $region2: #{forward.1} parent=1 // pred_check
      _
    $region3: #{forward.1} parent=1 // pred_check_branch
      %12 = sbr.rel (0) target = $region5
    $region4: #{forward.1} parent=1 // pred_region
      %s14 = ssub.s32 128, 128
      %15 = vsyncadd [#allocation3], %s14
      %s17 = sshll.u32 [#allocation2], 4
      %s18 = int_to_ptr.vmem [resolvable:$true] %s17
      %20 = dma.hbm_to_vmem [thread:$0]  %s0, 128, %s18, [#allocation3]
    $region5: #{forward.1} parent=1 // pred_fallthru
      _
    // Predicated region
    $region6: #{forward.1} parent=1 // pred_check
      _
    $region7: #{forward.1} parent=1 // pred_check_branch
      %22 = sbr.rel (0) target = $region9
    $region8: #{forward.1} parent=1 // pred_region
      %s24 = ssub.s32 384, 384
      %25 = vsyncadd [#allocation6], %s24
      %s26 = sshll.u32 [#allocation5], 4
      %s27 = int_to_ptr.vmem [resolvable:$true] %s26
      %32 = dma.hbm_to_vmem [thread:$0]  %s1, 384, %s27, [#allocation6], 128, 128, 8
    $region9: #{forward.1} parent=1 // pred_fallthru
      _
    // Predicated region
    $region10: #{forward.1} parent=1 // pred_check
      _
    $region11: #{forward.1} parent=1 // pred_check_branch
      %34 = sbr.rel (0) target = $region13
    $region12: #{forward.1} parent=1 // pred_region
      _
    $region13: #{forward.1} parent=1 // pred_fallthru
      _
    // Predicated region
    $region14: #{forward.1} parent=1 // pred_check
      _
    $region15: #{forward.1} parent=1 // pred_check_branch
      %36 = sbr.rel (0) target = $region17
    $region16: #{forward.1} parent=1 // pred_region
      %37 = dma.done [#allocation3], 128
    $region17: #{forward.1} parent=1 // pred_fallthru
      _
    // Predicated region
    $region18: #{forward.1} parent=1 // pred_check
      _
    $region19: #{forward.1} parent=1 // pred_check_branch
      %39 = sbr.rel (0) target = $region21
    $region20: #{forward.1} parent=1 // pred_region
      %40 = dma.done [#allocation6], 384
    $region21: #{forward.1} parent=1 // pred_fallthru
      _
    %v41 = vld [vmem:[#allocation2] sm:$0xff]
    %v42 = vld [vmem:[#allocation5] sm:$0xff]
    %v43 = vld [vmem:[#allocation5 + $0x8] sm:$0xff]
    %v44 = vld [vmem:[#allocation5 + $0x10] sm:$0xf]
    %v45 = vld [vmem:[%s2] sm:$0x1]
    %v47 = vlaneseq
    %v48 = vshrl.u32 %v47, 7
    %v49 = vsub.s32 0, %v48
    %v50 = vrot.slane %v45, %v49
    %vm52 = vcmask 162816
    %v54 = vsel %vm52, %v41, 0
    %vm56 = vcmask 1043456
    %v58 = vsel %vm56, %v44, 0
    %60 = vmatprep.subr.mxu0 0.0
    %61 = vmatpush1.msra.mxu0 %v42
    %62 = vmatprep.subr.mxu0 0.0
    %63 = vmatpush1.msra.mxu0 %v43
    %64 = vmatprep.subr.mxu0 0.0
    %65 = vmatpush1.msra.mxu0 %v58
    %66 = vmatprep.subr.mxu0 0.0
    %67 = vmatpush1.msra.mxu0 0.0
    %68 = vmatprep.subr.mxu0 0.0
    %69 = vmatpush1.msra.mxu0 0.0
    %70 = vmatprep.subr.mxu0 0.0
    %71 = vmatpush1.msra.mxu0 0.0
    %72 = vmatprep.subr.mxu0 0.0
    %73 = vmatpush1.msra.mxu0 0.0
    %74 = vmatprep.subr.mxu0 0.0
    %75 = vmatpush1.msra.mxu0 0.0
    %76 = vmatprep.subr.mxu0 0.0
    %77 = vmatpush1.msra.mxu0 0.0
    %78 = vmatprep.subr.mxu0 0.0
    %79 = vmatpush1.msra.mxu0 0.0
    %80 = vmatprep.subr.mxu0 0.0
    %81 = vmatpush1.msra.mxu0 0.0
    %82 = vmatprep.subr.mxu0 0.0
    %83 = vmatpush1.msra.mxu0 0.0
    %84 = vmatprep.subr.mxu0 0.0
    %85 = vmatpush1.msra.mxu0 0.0
    %86 = vmatprep.subr.mxu0 0.0
    %87 = vmatpush1.msra.mxu0 0.0
    %88 = vmatprep.subr.mxu0 0.0
    %89 = vmatpush1.msra.mxu0 0.0
    %90 = vmatprep.subr.mxu0 0.0
    %91 = vmatpush1.msra.mxu0 0.0
    %92 = vmatprep.subr.mxu0 0.0
    %93 = vmatpush1.msra.mxu0 0.0
    %94 = vmatprep.subr.mxu0 0.0
    %95 = vmatpush1.msra.mxu0 0.0
    %96 = vmatprep.subr.mxu0 0.0
    %97 = vmatpush1.msra.mxu0 0.0
    %98 = vmatprep.subr.mxu0 0.0
    %99 = vmatpush1.msra.mxu0 0.0
    %100 = vmatprep.subr.mxu0 0.0
    %101 = vmatpush1.msra.mxu0 0.0
    %102 = vmatprep.subr.mxu0 0.0
    %103 = vmatpush1.msra.mxu0 0.0
    %104 = vmatprep.subr.mxu0 0.0
    %105 = vmatpush1.msra.mxu0 0.0
    %106 = vmatprep.subr.mxu0 0.0
    %107 = vmatpush1.msra.mxu0 0.0
    %108 = vmatprep.subr.mxu0 0.0
    %109 = vmatpush1.msra.mxu0 0.0
    %110 = vmatprep.subr.mxu0 0.0
    %111 = vmatpush1.msra.mxu0 0.0
    %112 = vmatprep.subr.mxu0 0.0
    %113 = vmatpush1.msra.mxu0 0.0
    %114 = vmatprep.subr.mxu0 0.0
    %115 = vmatpush1.msra.mxu0 0.0
    %116 = vmatprep.subr.mxu0 0.0
    %117 = vmatpush1.msra.mxu0 0.0
    %118 = vmatprep.subr.mxu0 0.0
    %119 = vmatpush1.msra.mxu0 0.0
    %120 = vmatprep.subr.mxu0 0.0
    %121 = vmatpush1.msra.mxu0 0.0
    %122 = vmatprep.subr.mxu0 0.0
    %123 = vmatpush1.msra.mxu0 0.0
    %124 = vmatprep.mubr.f32.mxu0 0.0
    %125 = vmatmul.mubr.f32.gmra.mrb[0].mxu0 %v54
    %v126 = vpop.f32.mrb[0].mxu0
    %v127 = vadd.f32 %v50, %v126
    %v128 = vpop.f32.mrb[0].mxu0
    %129 = vdwg.mxu0
    %vm130 = vcmask 244736
    %131 = vst.msk [vmem:[#allocation7] sm:$0xff] %vm130, %v127
    // Predicated region
    $region22: #{forward.1} parent=1 // pred_check
      _
    $region23: #{forward.1} parent=1 // pred_check_branch
      %133 = sbr.rel (0) target = $region25
    $region24: #{forward.1} parent=1 // pred_region
      %s135 = ssub.s32 128, 128
      %136 = vsyncadd [#allocation4], %s135
      %s138 = sshll.u32 [#allocation7], 4
      %s139 = int_to_ptr.vmem [resolvable:$true] %s138
      %141 = dma.vmem_to_hbm [thread:$0]  %s139, 128, %s3, [#allocation4]
    $region25: #{forward.1} parent=1 // pred_fallthru
      _
    // Predicated region
    $region26: #{forward.1} parent=1 // pred_check
      _
    $region27: #{forward.1} parent=1 // pred_check_branch
      %143 = sbr.rel (0) target = $region29
    $region28: #{forward.1} parent=1 // pred_region
      %144 = dma.done [#allocation4], 128
    $region29: #{forward.1} parent=1 // pred_fallthru
      _
    %145 = vsyncpa [#allocation3], 1
    %146 = vsyncpa [#allocation6], 1
    %147 = vsyncpa [#allocation4], 1

</llo_original>
